<compile_context>
chip_gen: v6e
topology: v6e:2x2x1
jax: 0.10.0
libtpu: 0.0.40
codegen_flags: <defaults>
</compile_context>

<pallas_src>
import jax
import jax.numpy as jnp
from jax.experimental import pallas as pl
from jax.experimental.pallas import tpu as pltpu

EPS = 1e-3
LANE = 128


def _round_up(x, m):
    return (x + m - 1) // m * m


# ---------------- Pass A: conv tile + global BN-statistics accumulation ------------
def _stats_kernel(xcol_ref, w1_ref, sum_ref, mom_ref):
    # xcol_ref: (TILE, Kp)      w1_ref: (Kp, Cp)
    # sum_ref : (1, Cp)   resident accumulator (same block index across the grid)
    # mom_ref : (Cp, Cp)  resident accumulator of conv^T @ conv
    @pl.when(pl.program_id(0) == 0)
    def _():
        sum_ref[...] = jnp.zeros_like(sum_ref)
        mom_ref[...] = jnp.zeros_like(mom_ref)

    conv = jnp.dot(xcol_ref[...], w1_ref[...], preferred_element_type=jnp.float32)
    sum_ref[...] += jnp.sum(conv, axis=0, keepdims=True)
    # conv^T @ conv without materializing an explicit transpose.
    mom_ref[...] += jax.lax.dot_general(
        conv, conv, (((0,), (0,)), ((), ())), preferred_element_type=jnp.float32)


# ------------- Pass B: fully folded conv3x3 + BN1 + 1x1 + BN2 + ReLU ---------------
def _apply_kernel(xcol_ref, wbig_ref, bias_ref, out_ref):
    y = jnp.dot(xcol_ref[...], wbig_ref[...], preferred_element_type=jnp.float32)
    y = y + bias_ref[...]
    out_ref[...] = jnp.maximum(y, 0.0).astype(out_ref.dtype)


# ------------------------------- wrapper glue ---------------------------------------
def _im2col_3x3_same(x_nhwc):
    """Extract 3x3 'same' patches. Pure data rearrangement (glue)."""
    N, H, W, C = x_nhwc.shape
    xp = jnp.pad(x_nhwc, ((0, 0), (1, 1), (1, 1), (0, 0)))
    patches = [xp[:, kh:kh + H, kw:kw + W, :] for kh in range(3) for kw in range(3)]
    # feature index = (kh*3 + kw)*C + ci
    return jnp.concatenate(patches, axis=-1).reshape(N * H * W, 9 * C)


def depthwise3x3_forward(x_nchw, params, *, tile_rows=256):
    N, Cin, H, W = x_nchw.shape
    Cout = params["wp"].shape[0]
    NHW = N * H * W
    K = 9 * Cin

    # Lane / tile padding. tile_rows=256 keeps per-tile VMEM (double-buffered x_col
    # tile + weights) well under the 64 MiB v7x budget; raise for large inputs.
    Kp = _round_up(K, LANE)
    Cp = _round_up(Cin, LANE)
    Coutp = _round_up(Cout, LANE)
    tile_rows = min(tile_rows, _round_up(NHW, 8))
    NHWp = _round_up(NHW, tile_rows)
    num_tiles = NHWp // tile_rows

    f32 = jnp.float32
    x_nhwc = jnp.transpose(x_nchw, (0, 2, 3, 1)).astype(f32)
    x_col = _im2col_3x3_same(x_nhwc)                                   # (NHW, K)
    x_col = jnp.pad(x_col, ((0, NHWp - NHW), (0, Kp - K)))             # (NHWp, Kp)

    # PyTorch OIHW (Cin, Cin, 3, 3) -> GEMM operand (K, Cin), rows = (kh,kw,ci).
    w1_col = jnp.transpose(params["w1"], (2, 3, 1, 0)).reshape(K, Cin).astype(f32)
    w1p = jnp.pad(w1_col, ((0, Kp - K), (0, Cp - Cin)))                # (Kp, Cp)

    # ---- Pass A: accumulate sum(conv) and conv^T@conv over all NHW tiles ----
    sum_c, mom = pl.pallas_call(
        _stats_kernel,
        out_shape=(jax.ShapeDtypeStruct((1, Cp), f32),
                   jax.ShapeDtypeStruct((Cp, Cp), f32)),
        grid=(num_tiles,),
        in_specs=[
            pl.BlockSpec((tile_rows, Kp), lambda i: (i, 0)),
            pl.BlockSpec((Kp, Cp), lambda i: (0, 0)),
        ],
        out_specs=(
            pl.BlockSpec((1, Cp), lambda i: (0, 0)),
            pl.BlockSpec((Cp, Cp), lambda i: (0, 0)),
        ),
        compiler_params=pltpu.CompilerParams(dimension_semantics=("arbitrary",)),
    )(x_col, w1p)

    # ---- Tiny epilogue: derive BN1/BN2 analytically, fold everything into one GEMM.
    # (Parameter-sized math only; zero-padded rows contribute 0 to both accumulators,
    #  so dividing by the true NHW is exact.)
    g1 = params["g1"].astype(f32)
    be1 = params["be1"].astype(f32)
    g2 = params["g2"].astype(f32)
    be2 = params["be2"].astype(f32)
    bp = params["bp"].astype(f32)
    wp_mat = jnp.transpose(params["wp"][:, :, 0, 0]).astype(f32)       # (Cin, Cout)

    nhw = f32(NHW)
    mean1 = sum_c[0, :Cin] / nhw                                       # E[conv]
    m2 = mom[:Cin, :Cin] / nhw                                         # E[conv conv^T]
    cov1 = m2 - jnp.outer(mean1, mean1)                                # Cov(conv)
    var1 = jnp.maximum(jnp.diagonal(cov1), 0.0)

    a1 = g1 * jax.lax.rsqrt(var1 + EPS)                                # BN1 scale
    w_eff = a1[:, None] * wp_mat                                       # (Cin, Cout)
    c_z = (be1 - a1 * mean1) @ wp_mat + bp                             # constant into z
    mean2 = mean1 @ w_eff + c_z                                        # E[z]
    var2 = jnp.maximum(jnp.einsum("cj,cd,dj->j", w_eff, cov1, w_eff), 0.0)
    a2 = g2 * jax.lax.rsqrt(var2 + EPS)                                # BN2 scale

    w_final = w_eff * a2[None, :]                                      # (Cin, Cout)
    b_final = a2 * (c_z - mean2) + be2                                 # (Cout,)

    w_big = w1_col @ w_final                                           # (K, Cout)
    w_big = jnp.pad(w_big, ((0, Kp - K), (0, Coutp - Cout)))           # (Kp, Coutp)
    b_row = jnp.pad(b_final, (0, Coutp - Cout)).reshape(1, Coutp)

    # ---- Pass B: lane-dense, embarrassingly parallel apply + ReLU ----
    out_flat = pl.pallas_call(
        _apply_kernel,
        out_shape=jax.ShapeDtypeStruct((NHWp, Coutp), f32),
        grid=(num_tiles,),
        in_specs=[
            pl.BlockSpec((tile_rows, Kp), lambda i: (i, 0)),
            pl.BlockSpec((Kp, Coutp), lambda i: (0, 0)),
            pl.BlockSpec((1, Coutp), lambda i: (0, 0)),
        ],
        out_specs=pl.BlockSpec((tile_rows, Coutp), lambda i: (i, 0)),
        compiler_params=pltpu.CompilerParams(dimension_semantics=("parallel",)),
    )(x_col, w_big, b_row)

    out = out_flat[:NHW, :Cout].reshape(N, H, W, Cout)
    return jnp.transpose(out, (0, 3, 1, 2))                            # back to NCHW


def reference_forward(x, p):
    """Pure-JAX reference matching PyTorch training-mode forward (NCHW)."""
    dn = ("NCHW", "OIHW", "NCHW")
    y = jax.lax.conv_general_dilated(x, p["w1"], (1, 1), "SAME", dimension_numbers=dn)
    y = y + p["b1"][None, :, None, None]
    mu = jnp.mean(y, axis=(0, 2, 3), keepdims=True)
    var = jnp.mean((y - mu) ** 2, axis=(0, 2, 3), keepdims=True)
    y = p["g1"][None, :, None, None] * (y - mu) / jnp.sqrt(var + EPS) \
        + p["be1"][None, :, None, None]

    z = jax.lax.conv_general_dilated(y, p["wp"], (1, 1), "VALID", dimension_numbers=dn)
    z = z + p["bp"][None, :, None, None]
    mu2 = jnp.mean(z, axis=(0, 2, 3), keepdims=True)
    var2 = jnp.mean((z - mu2) ** 2, axis=(0, 2, 3), keepdims=True)
    z = p["g2"][None, :, None, None] * (z - mu2) / jnp.sqrt(var2 + EPS) \
        + p["be2"][None, :, None, None]
    return jnp.maximum(z, 0.0)


if __name__ == "__main__":
    Cin, Cout = 4, 8
    key = jax.random.PRNGKey(0)
    kx, k0, k1, k2, k3, k4, k5, k6, k7 = jax.random.split(key, 9)

    # Deterministic parameter init (shapes per the module's __init__, k=3).
    params = dict(
        w1=jax.random.normal(k0, (Cin, Cin, 3, 3), jnp.float32) / jnp.sqrt(9.0 * Cin),
        b1=0.1 * jax.random.normal(k1, (Cin,), jnp.float32),
        g1=1.0 + 0.1 * jax.random.normal(k2, (Cin,), jnp.float32),
        be1=0.1 * jax.random.normal(k3, (Cin,), jnp.float32),
        wp=jax.random.normal(k4, (Cout, Cin, 1, 1), jnp.float32) / jnp.sqrt(1.0 * Cin),
        bp=0.1 * jax.random.normal(k5, (Cout,), jnp.float32),
        g2=1.0 + 0.1 * jax.random.normal(k6, (Cout,), jnp.float32),
        be2=0.1 * jax.random.normal(k7, (Cout,), jnp.float32),
    )

    x = jax.random.normal(kx, (2, Cin, 16, 16), jnp.float32)   # NCHW, like PyTorch

    out = depthwise3x3_forward(x, params)
    out = jax.block_until_ready(out)

    ref = reference_forward(x, params)
    assert out.shape == ref.shape == (2, Cout, 16, 16)
    max_err = float(jnp.max(jnp.abs(out - ref)))
    assert bool(jnp.allclose(out, ref, rtol=5e-2, atol=5e-2)), f"max_err={max_err}"

    print("KERNEL_OK")
</pallas_src>

<mosaic_0001>
module attributes {stable_mosaic.version = 11 : i64} {
  func.func @_stats_kernel(%arg0: i32, %arg1: memref<256x128xf32, #tpu.memory_space<vmem>>, %arg2: memref<128x128xf32, #tpu.memory_space<vmem>>, %arg3: memref<1x128xf32, #tpu.memory_space<vmem>>, %arg4: memref<128x128xf32, #tpu.memory_space<vmem>>) attributes {dimension_semantics = [#tpu.dimension_semantics<arbitrary>], iteration_bounds = array<i64: 2>, scalar_prefetch = 0 : i64, scratch_operands = 0 : i64, tpu.core_type = #tpu.core_type<tc>, window_params = [{transform_indices = @transform_0, window_bounds = array<i64: 256, 128>}, {pipeline_mode = #tpu.pipeline_mode<synchronous>, transform_indices = @transform_1, window_bounds = array<i64: 128, 128>}, {pipeline_mode = #tpu.pipeline_mode<synchronous>, transform_indices = @transform_2, window_bounds = array<i64: 1, 128>}, {pipeline_mode = #tpu.pipeline_mode<synchronous>, transform_indices = @transform_3, window_bounds = array<i64: 128, 128>}]} {
    %c0_i32 = arith.constant 0 : i32
    %0 = arith.cmpi eq, %arg0, %c0_i32 : i32
    %1 = arith.extui %0 : i1 to i32
    %c0_i32_0 = arith.constant 0 : i32
    %2 = arith.cmpi ne, %1, %c0_i32_0 : i32
    scf.if %2 {
      %cst_14 = arith.constant 0.000000e+00 : f32
      %15 = vector.broadcast %cst_14 : f32 to vector<1x128xf32>
      %c0_15 = arith.constant 0 : index
      %c0_16 = arith.constant 0 : index
      %16 = vector.load %arg3[%c0_15, %c0_16] : memref<1x128xf32, #tpu.memory_space<vmem>>, vector<1x128xf32>
      tpu.vector_store %arg3[%c0_15, %c0_16], %15 {strides = array<i32>} : memref<1x128xf32, #tpu.memory_space<vmem>>, vector<1x128xf32>,
      %cst_17 = arith.constant 0.000000e+00 : f32
      %17 = vector.broadcast %cst_17 : f32 to vector<128x128xf32>
      %c0_18 = arith.constant 0 : index
      %c0_19 = arith.constant 0 : index
      %18 = vector.load %arg4[%c0_18, %c0_19] : memref<128x128xf32, #tpu.memory_space<vmem>>, vector<128x128xf32>
      tpu.vector_store %arg4[%c0_18, %c0_19], %17 {strides = array<i32>} : memref<128x128xf32, #tpu.memory_space<vmem>>, vector<128x128xf32>,
    } else {
    }
    %c0 = arith.constant 0 : index
    %c0_1 = arith.constant 0 : index
    %3 = vector.load %arg1[%c0, %c0_1] : memref<256x128xf32, #tpu.memory_space<vmem>>, vector<256x128xf32>
    %c0_2 = arith.constant 0 : index
    %c0_3 = arith.constant 0 : index
    %4 = vector.load %arg2[%c0_2, %c0_3] : memref<128x128xf32, #tpu.memory_space<vmem>>, vector<128x128xf32>
    %cst = arith.constant dense<0.000000e+00> : vector<256x128xf32>
    %5 = tpu.matmul %3, %4, %cst {dimension_numbers = #tpu.dot_dimension_numbers<[1], [0], [0], [1], [0, 0, 1, 1], [], []>} : vector<256x128xf32>, vector<128x128xf32>, vector<256x128xf32> -> vector<256x128xf32>
    %c0_4 = arith.constant 0 : index
    %c0_5 = arith.constant 0 : index
    %6 = vector.load %arg3[%c0_4, %c0_5] : memref<1x128xf32, #tpu.memory_space<vmem>>, vector<1x128xf32>
    %cst_6 = arith.constant dense<0.000000e+00> : vector<128xf32>
    %7 = vector.multi_reduction <add>, %5, %cst_6 [0] : vector<256x128xf32> to vector<128xf32>
    %8 = vector.shape_cast %7 : vector<128xf32> to vector<1x128xf32>
    %9 = arith.addf %6, %8 : vector<1x128xf32>
    %c0_7 = arith.constant 0 : index
    %c0_8 = arith.constant 0 : index
    %10 = vector.load %arg3[%c0_7, %c0_8] : memref<1x128xf32, #tpu.memory_space<vmem>>, vector<1x128xf32>
    tpu.vector_store %arg3[%c0_7, %c0_8], %9 {strides = array<i32>} : memref<1x128xf32, #tpu.memory_space<vmem>>, vector<1x128xf32>,
    %c0_9 = arith.constant 0 : index
    %c0_10 = arith.constant 0 : index
    %11 = vector.load %arg4[%c0_9, %c0_10] : memref<128x128xf32, #tpu.memory_space<vmem>>, vector<128x128xf32>
    %cst_11 = arith.constant dense<0.000000e+00> : vector<128x128xf32>
    %12 = tpu.matmul %5, %5, %cst_11 {dimension_numbers = #tpu.dot_dimension_numbers<[0], [0], [1], [1], [0, 1, 1, 1], [], []>} : vector<256x128xf32>, vector<256x128xf32>, vector<128x128xf32> -> vector<128x128xf32>
    %13 = arith.addf %11, %12 : vector<128x128xf32>
    %c0_12 = arith.constant 0 : index
    %c0_13 = arith.constant 0 : index
    %14 = vector.load %arg4[%c0_12, %c0_13] : memref<128x128xf32, #tpu.memory_space<vmem>>, vector<128x128xf32>
    tpu.vector_store %arg4[%c0_12, %c0_13], %13 {strides = array<i32>} : memref<128x128xf32, #tpu.memory_space<vmem>>, vector<128x128xf32>,
    return
  }
  func.func @transform_0(%arg0: i32) -> (i32, i32) {
    %c0_i32 = arith.constant 0 : i32
    %c0_i32_0 = arith.constant 0 : i32
    return %arg0, %c0_i32 : i32, i32
  }
  func.func @transform_1(%arg0: i32) -> (i32, i32) {
    %c0_i32 = arith.constant 0 : i32
    %c0_i32_0 = arith.constant 0 : i32
    %c0_i32_1 = arith.constant 0 : i32
    return %c0_i32, %c0_i32_0 : i32, i32
  }
  func.func @transform_2(%arg0: i32) -> (i32, i32) {
    %c0_i32 = arith.constant 0 : i32
    %c0_i32_0 = arith.constant 0 : i32
    %c0_i32_1 = arith.constant 0 : i32
    return %c0_i32, %c0_i32_0 : i32, i32
  }
  func.func @transform_3(%arg0: i32) -> (i32, i32) {
    %c0_i32 = arith.constant 0 : i32
    %c0_i32_0 = arith.constant 0 : i32
    %c0_i32_1 = arith.constant 0 : i32
    return %c0_i32, %c0_i32_0 : i32, i32
  }
}

</mosaic_0001>

<llo_original>
// kernel: tpu_custom_call.1
$region0: #{tpu_custom_call.1}
  #allocation0 [shape = 'u32[]', space=smem, size = 0x4, offset = 0x4, fixed_abs, tag = 'smem constant byte address 0x4 - core index']
  #allocation1 [shape = 'u32[144,128]{1,0:T(1,128)}', space=vmem, size = 0x12000, scoped, tag = 'internal scratch']
  %s0 = inlined_call_operand.hbm [shape: f32[512,128], index: 0, kind: input, shape index: {}]
  %s1 = inlined_call_operand.hbm [shape: f32[128,128], index: 1, kind: input, shape index: {}]
  %s2 = inlined_call_operand.hbm [shape: f32[1,128], index: 2, kind: output, shape index: {0}]
  %s3 = inlined_call_operand.hbm [shape: f32[128,128], index: 3, kind: output, shape index: {1}]
  %4 = xla_tuple %s2, %s3
  %s5 = sld [smem:[#allocation0]]
  $region61: #{tpu_custom_call.1} parent=0
    _
  %s7 = ssub.s32 1, %s5
  %s8 = scalar_select 0, %s7, %s5
  $region1: #{tpu_custom_call.1} parent=0
    #allocation2 [shape = 'u8[262144]{0}', space=vmem, size = 0x40000, scoped, tag = 'input window, operand 0']
    #allocation3 [shape = 's32[2]{0}', space=sflag, size = 0x8, scoped, tag = 'scoped memory for tpu_custom_call.1']
    #allocation4 [shape = 's32[2]{0}', space=sflag, size = 0x8, scoped, tag = 'scoped memory for tpu_custom_call.1']
    #allocation5 [shape = 'u8[65536]{0}', space=vmem, size = 0x10000, scoped, tag = 'input window, operand 1, single buffered']
    #allocation6 [shape = 's32[1]{0}', space=sflag, size = 0x4, scoped, tag = 'scoped memory for tpu_custom_call.1']
    #allocation7 [shape = 'u8[512]{0}', space=vmem, size = 0x400, scoped, tag = 'output window, operand 0, single buffered']
    #allocation8 [shape = 'u8[65536]{0}', space=vmem, size = 0x10000, scoped, tag = 'output window, operand 1, single buffered']
    #allocation9 [shape = 's32[1]{0}', space=sflag, size = 0x4, scoped, tag = 'scoped memory for tpu_custom_call.1']
    %9 = vsyncpa [#allocation3], 0
    %s10 = scalar_lea.sflag [#allocation3], 1
    %11 = vsyncpa %s10, 0
    %12 = vsyncpa [#allocation6], 0
    %13 = vsyncpa [#allocation4], 0
    %14 = vsyncpa [#allocation9], 0
    loop: start=0, step=1, limit=4
    $region2: #{tpu_custom_call.1} parent=1 // loop_pre_header
      _
    $region3: #{tpu_custom_call.1} parent=1 // loop_header
      %s16 = sphi 0, %s20
      %p17 = scmp.ge.s32.totalorder %s16, 4
      %s26 = sphi 0, %s28
      %s29 = sphi 0, %s26
      %s30 = sphi 0, %s29
      %s46 = sphi 0, %s30
      %s50 = sphi 0, %s50
      %s52 = sphi 0, %s50
      %s53 = sphi 0, %s52
      %s67 = sphi 0, %s53
      %s71 = sphi 0, %s71
      %s73 = sphi 0, %s71
      %s74 = sphi 0, %s73
      %s88 = sphi 0, %s74
      %s92 = sphi 0, %s92
      %s94 = sphi 0, %s92
      %s95 = sphi 0, %s94
      %s109 = sphi 0, %s95
    $region4: #{tpu_custom_call.1} parent=1 // loop_header_branch
      %19 = sbr.rel (%p17) target = $region8
    $region5: #{tpu_custom_call.1} parent=1 // loop_body
      %s21 = ssub.s32 %s16, 1
      %s22 = ssub.s32 %s16, 2
      %s23 = sadd.s32 %s16, 1
      %s24 = ssub.s32 %s16, %s23
      %p25 = scmp.eq.s32.totalorder %s24, 0
      %s27 = sadd.s32 %s26, 1
      %s28 = scalar_select %p25, %s26, %s27
      %p31 = pneg %p25
      %p32 = scmp.eq.s32.totalorder %s16, 1
      %p33 = por %p31, %p32
      %p34 = scmp.ne.s32.totalorder %s26, %s29
      %p35 = scmp.eq.s32.totalorder %s16, 0
      %p36 = por %p34, %p35
      %p37 = scmp.ne.s32.totalorder %s26, %s29
      %p38 = scmp.eq.s32.totalorder %s21, 1
      %p39 = por %p37, %p38
      %p40 = scmp.ne.s32.totalorder %s29, %s30
      %p41 = scmp.eq.s32.totalorder %s21, 0
      %p42 = por %p40, %p41
      %p43 = scmp.ne.s32.totalorder %s29, %s30
      %p44 = scmp.eq.s32.totalorder %s22, 1
      %p45 = por %p43, %p44
      %p47 = scmp.ne.s32.totalorder %s30, %s46
      %p48 = scmp.eq.s32.totalorder %s22, 0
      %p49 = por %p47, %p48
      %s51 = sadd.s32 %s50, 1
      %p54 = scmp.eq.s32.totalorder %s16, 1
      %p55 = scmp.ne.s32.totalorder %s50, %s52
      %p56 = scmp.eq.s32.totalorder %s16, 0
      %p57 = por %p55, %p56
      %p58 = scmp.ne.s32.totalorder %s50, %s52
      %p59 = scmp.eq.s32.totalorder %s21, 1
      %p60 = por %p58, %p59
      %p61 = scmp.ne.s32.totalorder %s52, %s53
      %p62 = scmp.eq.s32.totalorder %s21, 0
      %p63 = por %p61, %p62
      %p64 = scmp.ne.s32.totalorder %s52, %s53
      %p65 = scmp.eq.s32.totalorder %s22, 1
      %p66 = por %p64, %p65
      %p68 = scmp.ne.s32.totalorder %s53, %s67
      %p69 = scmp.eq.s32.totalorder %s22, 0
      %p70 = por %p68, %p69
      %s72 = sadd.s32 %s71, 1
      %p75 = scmp.eq.s32.totalorder %s16, 1
      %p76 = scmp.ne.s32.totalorder %s71, %s73
      %p77 = scmp.eq.s32.totalorder %s16, 0
      %p78 = por %p76, %p77
      %p79 = scmp.ne.s32.totalorder %s71, %s73
      %p80 = scmp.eq.s32.totalorder %s21, 1
      %p81 = por %p79, %p80
      %p82 = scmp.ne.s32.totalorder %s73, %s74
      %p83 = scmp.eq.s32.totalorder %s21, 0
      %p84 = por %p82, %p83
      %p85 = scmp.ne.s32.totalorder %s73, %s74
      %p86 = scmp.eq.s32.totalorder %s22, 1
      %p87 = por %p85, %p86
      %p89 = scmp.ne.s32.totalorder %s74, %s88
      %p90 = scmp.eq.s32.totalorder %s22, 0
      %p91 = por %p89, %p90
      %s93 = sadd.s32 %s92, 1
      %p96 = scmp.eq.s32.totalorder %s16, 1
      %p97 = scmp.ne.s32.totalorder %s92, %s94
      %p98 = scmp.eq.s32.totalorder %s16, 0
      %p99 = por %p97, %p98
      %p100 = scmp.ne.s32.totalorder %s92, %s94
      %p101 = scmp.eq.s32.totalorder %s21, 1
      %p102 = por %p100, %p101
      %p103 = scmp.ne.s32.totalorder %s94, %s95
      %p104 = scmp.eq.s32.totalorder %s21, 0
      %p105 = por %p103, %p104
      %p106 = scmp.ne.s32.totalorder %s94, %s95
      %p107 = scmp.eq.s32.totalorder %s22, 1
      %p108 = por %p106, %p107
      %p110 = scmp.ne.s32.totalorder %s95, %s109
      %p111 = scmp.eq.s32.totalorder %s22, 0
      %p112 = por %p110, %p111
      %p113 = scmp.le.s32.totalorder 1, %s16
      %p114 = scmp.lt.s32.totalorder %s16, 3
      %p115 = pnand %p113, %p114
      %p116 = pneg %p115
      // Predicated region
      $region9: #{tpu_custom_call.1} parent=5 // pred_check
        _
      $region10: #{tpu_custom_call.1} parent=5 // pred_check_branch
        %118 = sbr.rel (%p115) target = $region12
      $region11: #{tpu_custom_call.1} parent=5 // pred_region
        %s119 = ssub.s32 %s16, 1
        // Predicated region
        $region13: #{tpu_custom_call.1} parent=11 // pred_check
          %p120 = pneg %p63
        $region14: #{tpu_custom_call.1} parent=11 // pred_check_branch
          %122 = sbr.rel (%p120) target = $region16
        $region15: #{tpu_custom_call.1} parent=11 // pred_region
          %s124 = ssub.s32 2048, 2048
          %125 = vsyncadd [#allocation6], %s124
          %s126 = sshll.u32 [#allocation5], 4
          %s127 = int_to_ptr.vmem [resolvable:$true] %s126
          %132 = dma.hbm_to_vmem [thread:$0]  %s1, 2048, %s127, [#allocation6], 128, 128, 8
        $region16: #{tpu_custom_call.1} parent=11 // pred_fallthru
          _
      $region12: #{tpu_custom_call.1} parent=5 // pred_fallthru
        _
      %p133 = scmp.lt.s32.totalorder %s16, 2
      // Predicated region
      $region17: #{tpu_custom_call.1} parent=5 // pred_check
        %p134 = pneg %p133
      $region18: #{tpu_custom_call.1} parent=5 // pred_check_branch
        %136 = sbr.rel (%p134) target = $region20
      $region19: #{tpu_custom_call.1} parent=5 // pred_region
        // Predicated region
        $region21: #{tpu_custom_call.1} parent=19 // pred_check
          %p137 = pneg %p36
        $region22: #{tpu_custom_call.1} parent=19 // pred_check_branch
          %139 = sbr.rel (%p137) target = $region24
        $region23: #{tpu_custom_call.1} parent=19 // pred_region
          %s140 = sand.u32 %s26, 1
          %s141 = scalar_lea.sflag [#allocation3], %s140
          %s142 = sand.u32 %s26, 1
          %s143 = smul.addr %s142, 256
          %s144 = scalar_lea.vmem [#allocation2], %s143
          %s145 = smul.u32 32, %s16
          %s147 = ssub.s32 4096, 4096
          %148 = vsyncadd %s141, %s147
          %s149 = smul.addr %s145, 128
          %s150 = scalar_lea.hbm %s0, %s149
          %s151 = sshll.u32 %s144, 4
          %s152 = int_to_ptr.vmem [resolvable:$true] %s151
          %157 = dma.hbm_to_vmem [thread:$0]  %s150, 4096, %s152, %s141, 128, 128, 8
        $region24: #{tpu_custom_call.1} parent=19 // pred_fallthru
          _
      $region20: #{tpu_custom_call.1} parent=5 // pred_fallthru
        _
      %p158 = scmp.le.s32.totalorder 1, %s16
      %p159 = scmp.lt.s32.totalorder %s16, 3
      %p160 = pnand %p158, %p159
      %p161 = pneg %p160
      // Predicated region
      $region25: #{tpu_custom_call.1} parent=5 // pred_check
        _
      $region26: #{tpu_custom_call.1} parent=5 // pred_check_branch
        %163 = sbr.rel (%p160) target = $region28
      $region27: #{tpu_custom_call.1} parent=5 // pred_region
        %s164 = ssub.s32 %s16, 1
        %s165 = sand.u32 %s29, 1
        %s166 = scalar_lea.sflag [#allocation3], %s165
        %s167 = sand.u32 %s29, 1
        %s168 = smul.addr %s167, 256
        %s169 = scalar_lea.vmem [#allocation2], %s168
        // Predicated region
        $region29: #{tpu_custom_call.1} parent=27 // pred_check
          %p170 = pneg %p42
        $region30: #{tpu_custom_call.1} parent=27 // pred_check_branch
          %172 = sbr.rel (%p170) target = $region32
        $region31: #{tpu_custom_call.1} parent=27 // pred_region
          %173 = dma.done %s166, 4096
        $region32: #{tpu_custom_call.1} parent=27 // pred_fallthru
          _
        // Predicated region
        $region33: #{tpu_custom_call.1} parent=27 // pred_check
          %p174 = pneg %p63
        $region34: #{tpu_custom_call.1} parent=27 // pred_check_branch
          %176 = sbr.rel (%p174) target = $region36
        $region35: #{tpu_custom_call.1} parent=27 // pred_region
          %177 = dma.done [#allocation6], 2048
        $region36: #{tpu_custom_call.1} parent=27 // pred_fallthru
          _
        %s178 = sand.u32 %s29, 1
        %s179 = scalar_lea.sflag [#allocation3], %s178
        %s180 = sand.u32 %s29, 1
        %s181 = smul.addr %s180, 256
        %s182 = scalar_lea.vmem [#allocation2], %s181
        %p183 = pneg %p42
        %p184 = pneg %p39
        %p185 = pneg %p63
        %p186 = pneg %p60
        %p187 = pneg %p84
        %p188 = pneg %p81
        %p189 = pneg %p105
        %p190 = pneg %p102
        %s191 = smul.u32 32, %s21
        %p192 = scmp.eq.s32.totalorder %s21, 0
        // Predicated region
        $region37: #{tpu_custom_call.1} parent=27 // pred_check
          %p193 = pneg %p192
        $region38: #{tpu_custom_call.1} parent=27 // pred_check_branch
          %195 = sbr.rel (%p193) target = $region40
        $region39: #{tpu_custom_call.1} parent=27 // pred_region
          %196 = vst [vmem:[#allocation7] sm:$0x1] 0.0
          %197 = vst [vmem:[#allocation8] sm:$0xff] 0.0
          %198 = vst [vmem:[#allocation8 + $0x8] sm:$0xff] 0.0
          %199 = vst [vmem:[#allocation8 + $0x10] sm:$0xff] 0.0
          %200 = vst [vmem:[#allocation8 + $0x18] sm:$0xff] 0.0
          %201 = vst [vmem:[#allocation8 + $0x20] sm:$0xff] 0.0
          %202 = vst [vmem:[#allocation8 + $0x28] sm:$0xff] 0.0
          %203 = vst [vmem:[#allocation8 + $0x30] sm:$0xff] 0.0
          %204 = vst [vmem:[#allocation8 + $0x38] sm:$0xff] 0.0
          %205 = vst [vmem:[#allocation8 + $0x40] sm:$0xff] 0.0
          %206 = vst [vmem:[#allocation8 + $0x48] sm:$0xff] 0.0
          %207 = vst [vmem:[#allocation8 + $0x50] sm:$0xff] 0.0
          %208 = vst [vmem:[#allocation8 + $0x58] sm:$0xff] 0.0
          %209 = vst [vmem:[#allocation8 + $0x60] sm:$0xff] 0.0
          %210 = vst [vmem:[#allocation8 + $0x68] sm:$0xff] 0.0
          %211 = vst [vmem:[#allocation8 + $0x70] sm:$0xff] 0.0
          %212 = vst [vmem:[#allocation8 + $0x78] sm:$0xff] 0.0
        $region40: #{tpu_custom_call.1} parent=27 // pred_fallthru
          _
        %v213 = vld [vmem:[%s169] sm:$0xff]
        %v214 = vld [vmem:[%s169 + $0x8] sm:$0xff]
        %v215 = vld [vmem:[%s169 + $0x10] sm:$0xff]
        %v216 = vld [vmem:[%s169 + $0x18] sm:$0xff]
        %v217 = vld [vmem:[%s169 + $0x20] sm:$0xff]
        %v218 = vld [vmem:[%s169 + $0x28] sm:$0xff]
        %v219 = vld [vmem:[%s169 + $0x30] sm:$0xff]
        %v220 = vld [vmem:[%s169 + $0x38] sm:$0xff]
        %v221 = vld [vmem:[%s169 + $0x40] sm:$0xff]
        %v222 = vld [vmem:[%s169 + $0x48] sm:$0xff]
        %v223 = vld [vmem:[%s169 + $0x50] sm:$0xff]
        %v224 = vld [vmem:[%s169 + $0x58] sm:$0xff]
        %v225 = vld [vmem:[%s169 + $0x60] sm:$0xff]
        %v226 = vld [vmem:[%s169 + $0x68] sm:$0xff]
        %v227 = vld [vmem:[%s169 + $0x70] sm:$0xff]
        %v228 = vld [vmem:[%s169 + $0x78] sm:$0xff]
        %v229 = vld [vmem:[%s169 + $0x80] sm:$0xff]
        %v230 = vld [vmem:[%s169 + $0x88] sm:$0xff]
        %v231 = vld [vmem:[%s169 + $0x90] sm:$0xff]
        %v232 = vld [vmem:[%s169 + $0x98] sm:$0xff]
        %v233 = vld [vmem:[%s169 + $0xa0] sm:$0xff]
        %v234 = vld [vmem:[%s169 + $0xa8] sm:$0xff]
        %v235 = vld [vmem:[%s169 + $0xb0] sm:$0xff]
        %v236 = vld [vmem:[%s169 + $0xb8] sm:$0xff]
        %v237 = vld [vmem:[%s169 + $0xc0] sm:$0xff]
        %v238 = vld [vmem:[%s169 + $0xc8] sm:$0xff]
        %v239 = vld [vmem:[%s169 + $0xd0] sm:$0xff]
        %v240 = vld [vmem:[%s169 + $0xd8] sm:$0xff]
        %v241 = vld [vmem:[%s169 + $0xe0] sm:$0xff]
        %v242 = vld [vmem:[%s169 + $0xe8] sm:$0xff]
        %v243 = vld [vmem:[%s169 + $0xf0] sm:$0xff]
        %v244 = vld [vmem:[%s169 + $0xf8] sm:$0xff]
        %v245 = vld [vmem:[#allocation5] sm:$0xff]
        %v246 = vld [vmem:[#allocation5 + $0x8] sm:$0xff]
        %v247 = vld [vmem:[#allocation5 + $0x10] sm:$0xff]
        %v248 = vld [vmem:[#allocation5 + $0x18] sm:$0xff]
        %v249 = vld [vmem:[#allocation5 + $0x20] sm:$0xff]
        %v250 = vld [vmem:[#allocation5 + $0x28] sm:$0xff]
        %v251 = vld [vmem:[#allocation5 + $0x30] sm:$0xff]
        %v252 = vld [vmem:[#allocation5 + $0x38] sm:$0xff]
        %v253 = vld [vmem:[#allocation5 + $0x40] sm:$0xff]
        %v254 = vld [vmem:[#allocation5 + $0x48] sm:$0xff]
        %v255 = vld [vmem:[#allocation5 + $0x50] sm:$0xff]
        %v256 = vld [vmem:[#allocation5 + $0x58] sm:$0xff]
        %v257 = vld [vmem:[#allocation5 + $0x60] sm:$0xff]
        %v258 = vld [vmem:[#allocation5 + $0x68] sm:$0xff]
        %v259 = vld [vmem:[#allocation5 + $0x70] sm:$0xff]
        %v260 = vld [vmem:[#allocation5 + $0x78] sm:$0xff]
        %261 = vmatprep.subr.mxu0 0.0
        %262 = vmatpush1.msra.mxu0 %v260
        %263 = vmatprep.subr.mxu0 0.0
        %264 = vmatpush1.msra.mxu0 %v259
        %265 = vmatprep.subr.mxu0 0.0
        %266 = vmatpush1.msra.mxu0 %v258
        %267 = vmatprep.subr.mxu0 0.0
        %268 = vmatpush1.msra.mxu0 %v257
        %269 = vmatprep.subr.mxu0 0.0
        %270 = vmatpush1.msra.mxu0 %v256
        %271 = vmatprep.subr.mxu0 0.0
        %272 = vmatpush1.msra.mxu0 %v255
        %273 = vmatprep.subr.mxu0 0.0
        %274 = vmatpush1.msra.mxu0 %v254
        %275 = vmatprep.subr.mxu0 0.0
        %276 = vmatpush1.msra.mxu0 %v253
        %277 = vmatprep.subr.mxu0 0.0
        %278 = vmatpush1.msra.mxu0 %v252
        %279 = vmatprep.subr.mxu0 0.0
        %280 = vmatpush1.msra.mxu0 %v251
        %281 = vmatprep.subr.mxu0 0.0
        %282 = vmatpush1.msra.mxu0 %v250
        %283 = vmatprep.subr.mxu0 0.0
        %284 = vmatpush1.msra.mxu0 %v249
        %285 = vmatprep.subr.mxu0 0.0
        %286 = vmatpush1.msra.mxu0 %v248
        %287 = vmatprep.subr.mxu0 0.0
        %288 = vmatpush1.msra.mxu0 %v247
        %289 = vmatprep.subr.mxu0 0.0
        %290 = vmatpush1.msra.mxu0 %v246
        %291 = vmatprep.subr.mxu0 0.0
        %292 = vmatpush1.msra.mxu0 %v245
        %293 = vmatprep.subr.mxu0 0.0
        %294 = vmatpush2.msra.mxu0 0.0
        %295 = vmatprep.subr.mxu0 0.0
        %296 = vmatpush2.msra.mxu0 0.0
        %297 = vmatprep.subr.mxu0 0.0
        %298 = vmatpush2.msra.mxu0 0.0
        %299 = vmatprep.subr.mxu0 0.0
        %300 = vmatpush2.msra.mxu0 0.0
        %301 = vmatprep.subr.mxu0 0.0
        %302 = vmatpush2.msra.mxu0 0.0
        %303 = vmatprep.subr.mxu0 0.0
        %304 = vmatpush2.msra.mxu0 0.0
        %305 = vmatprep.subr.mxu0 0.0
        %306 = vmatpush2.msra.mxu0 0.0
        %307 = vmatprep.subr.mxu0 0.0
        %308 = vmatpush2.msra.mxu0 0.0
        %309 = vmatprep.subr.mxu0 0.0
        %310 = vmatpush2.msra.mxu0 0.0
        %311 = vmatprep.subr.mxu0 0.0
        %312 = vmatpush2.msra.mxu0 0.0
        %313 = vmatprep.subr.mxu0 0.0
        %314 = vmatpush2.msra.mxu0 0.0
        %315 = vmatprep.subr.mxu0 0.0
        %316 = vmatpush2.msra.mxu0 0.0
        %317 = vmatprep.subr.mxu0 0.0
        %318 = vmatpush2.msra.mxu0 0.0
        %319 = vmatprep.subr.mxu0 0.0
        %320 = vmatpush2.msra.mxu0 0.0
        %321 = vmatprep.subr.mxu0 0.0
        %322 = vmatpush2.msra.mxu0 0.0
        %323 = vmatprep.subr.mxu0 0.0
        %324 = vmatpush2.msra.mxu0 0.0
        %325 = vmatprep.mubr.f32.mxu0 0.0
        %326 = vmatmul.mubr.f32.gmra.mxu0 %v213
        %v327 = vpop.f32.mrf.mxu0
        %v328 = vadd.f32 0.0, %v327
        %v329 = vpop.f32.mrf.mxu0
        %330 = vmatprep.mubr.f32.mxu0 0.0
        %331 = vmatmul.mubr.f32.gmra.mxu0 %v214
        %v332 = vpop.f32.mrf.mxu0
        %v333 = vadd.f32 0.0, %v332
        %v334 = vpop.f32.mrf.mxu0
        %335 = vmatprep.mubr.f32.mxu0 0.0
        %336 = vmatmul.mubr.f32.gmra.mxu0 %v215
        %v337 = vpop.f32.mrf.mxu0
        %v338 = vadd.f32 0.0, %v337
        %v339 = vpop.f32.mrf.mxu0
        %340 = vmatprep.mubr.f32.mxu0 0.0
        %341 = vmatmul.mubr.f32.gmra.mxu0 %v216
        %v342 = vpop.f32.mrf.mxu0
        %v343 = vadd.f32 0.0, %v342
        %v344 = vpop.f32.mrf.mxu0
        %345 = vmatprep.mubr.f32.mxu0 0.0
        %346 = vmatmul.mubr.f32.gmra.mxu0 %v217
        %v347 = vpop.f32.mrf.mxu0
        %v348 = vadd.f32 0.0, %v347
        %v349 = vpop.f32.mrf.mxu0
        %350 = vmatprep.mubr.f32.mxu0 0.0
        %351 = vmatmul.mubr.f32.gmra.mxu0 %v218
        %v352 = vpop.f32.mrf.mxu0
        %v353 = vadd.f32 0.0, %v352
        %v354 = vpop.f32.mrf.mxu0
        %355 = vmatprep.mubr.f32.mxu0 0.0
        %356 = vmatmul.mubr.f32.gmra.mxu0 %v219
        %v357 = vpop.f32.mrf.mxu0
        %v358 = vadd.f32 0.0, %v357
        %v359 = vpop.f32.mrf.mxu0
        %360 = vmatprep.mubr.f32.mxu0 0.0
        %361 = vmatmul.mubr.f32.gmra.mxu0 %v220
        %v362 = vpop.f32.mrf.mxu0
        %v363 = vadd.f32 0.0, %v362
        %v364 = vpop.f32.mrf.mxu0
        %365 = vmatprep.mubr.f32.mxu0 0.0
        %366 = vmatmul.mubr.f32.gmra.mxu0 %v221
        %v367 = vpop.f32.mrf.mxu0
        %v368 = vadd.f32 0.0, %v367
        %v369 = vpop.f32.mrf.mxu0
        %370 = vmatprep.mubr.f32.mxu0 0.0
        %371 = vmatmul.mubr.f32.gmra.mxu0 %v222
        %v372 = vpop.f32.mrf.mxu0
        %v373 = vadd.f32 0.0, %v372
        %v374 = vpop.f32.mrf.mxu0
        %375 = vmatprep.mubr.f32.mxu0 0.0
        %376 = vmatmul.mubr.f32.gmra.mxu0 %v223
        %v377 = vpop.f32.mrf.mxu0
        %v378 = vadd.f32 0.0, %v377
        %v379 = vpop.f32.mrf.mxu0
        %380 = vmatprep.mubr.f32.mxu0 0.0
        %381 = vmatmul.mubr.f32.gmra.mxu0 %v224
        %v382 = vpop.f32.mrf.mxu0
        %v383 = vadd.f32 0.0, %v382
        %v384 = vpop.f32.mrf.mxu0
        %385 = vmatprep.mubr.f32.mxu0 0.0
        %386 = vmatmul.mubr.f32.gmra.mxu0 %v225
        %v387 = vpop.f32.mrf.mxu0
        %v388 = vadd.f32 0.0, %v387
        %v389 = vpop.f32.mrf.mxu0
        %390 = vmatprep.mubr.f32.mxu0 0.0
        %391 = vmatmul.mubr.f32.gmra.mxu0 %v226
        %v392 = vpop.f32.mrf.mxu0
        %v393 = vadd.f32 0.0, %v392
        %v394 = vpop.f32.mrf.mxu0
        %395 = vmatprep.mubr.f32.mxu0 0.0
        %396 = vmatmul.mubr.f32.gmra.mxu0 %v227
        %v397 = vpop.f32.mrf.mxu0
        %v398 = vadd.f32 0.0, %v397
        %v399 = vpop.f32.mrf.mxu0
        %400 = vmatprep.mubr.f32.mxu0 0.0
        %401 = vmatmul.mubr.f32.gmra.mxu0 %v228
        %v402 = vpop.f32.mrf.mxu0
        %v403 = vadd.f32 0.0, %v402
        %v404 = vpop.f32.mrf.mxu0
        %405 = vmatprep.mubr.f32.mxu0 0.0
        %406 = vmatmul.mubr.f32.gmra.mxu0 %v229
        %v407 = vpop.f32.mrf.mxu0
        %v408 = vadd.f32 0.0, %v407
        %v409 = vpop.f32.mrf.mxu0
        %410 = vmatprep.mubr.f32.mxu0 0.0
        %411 = vmatmul.mubr.f32.gmra.mxu0 %v230
        %v412 = vpop.f32.mrf.mxu0
        %v413 = vadd.f32 0.0, %v412
        %v414 = vpop.f32.mrf.mxu0
        %415 = vmatprep.mubr.f32.mxu0 0.0
        %416 = vmatmul.mubr.f32.gmra.mxu0 %v231
        %v417 = vpop.f32.mrf.mxu0
        %v418 = vadd.f32 0.0, %v417
        %v419 = vpop.f32.mrf.mxu0
        %420 = vmatprep.mubr.f32.mxu0 0.0
        %421 = vmatmul.mubr.f32.gmra.mxu0 %v232
        %v422 = vpop.f32.mrf.mxu0
        %v423 = vadd.f32 0.0, %v422
        %v424 = vpop.f32.mrf.mxu0
        %425 = vmatprep.mubr.f32.mxu0 0.0
        %426 = vmatmul.mubr.f32.gmra.mxu0 %v233
        %v427 = vpop.f32.mrf.mxu0
        %v428 = vadd.f32 0.0, %v427
        %v429 = vpop.f32.mrf.mxu0
        %430 = vmatprep.mubr.f32.mxu0 0.0
        %431 = vmatmul.mubr.f32.gmra.mxu0 %v234
        %v432 = vpop.f32.mrf.mxu0
        %v433 = vadd.f32 0.0, %v432
        %v434 = vpop.f32.mrf.mxu0
        %435 = vmatprep.mubr.f32.mxu0 0.0
        %436 = vmatmul.mubr.f32.gmra.mxu0 %v235
        %v437 = vpop.f32.mrf.mxu0
        %v438 = vadd.f32 0.0, %v437
        %v439 = vpop.f32.mrf.mxu0
        %440 = vmatprep.mubr.f32.mxu0 0.0
        %441 = vmatmul.mubr.f32.gmra.mxu0 %v236
        %v442 = vpop.f32.mrf.mxu0
        %v443 = vadd.f32 0.0, %v442
        %v444 = vpop.f32.mrf.mxu0
        %445 = vmatprep.mubr.f32.mxu0 0.0
        %446 = vmatmul.mubr.f32.gmra.mxu0 %v237
        %v447 = vpop.f32.mrf.mxu0
        %v448 = vadd.f32 0.0, %v447
        %v449 = vpop.f32.mrf.mxu0
        %450 = vmatprep.mubr.f32.mxu0 0.0
        %451 = vmatmul.mubr.f32.gmra.mxu0 %v238
        %v452 = vpop.f32.mrf.mxu0
        %v453 = vadd.f32 0.0, %v452
        %v454 = vpop.f32.mrf.mxu0
        %455 = vmatprep.mubr.f32.mxu0 0.0
        %456 = vmatmul.mubr.f32.gmra.mxu0 %v239
        %v457 = vpop.f32.mrf.mxu0
        %v458 = vadd.f32 0.0, %v457
        %v459 = vpop.f32.mrf.mxu0
        %460 = vmatprep.mubr.f32.mxu0 0.0
        %461 = vmatmul.mubr.f32.gmra.mxu0 %v240
        %v462 = vpop.f32.mrf.mxu0
        %v463 = vadd.f32 0.0, %v462
        %v464 = vpop.f32.mrf.mxu0
        %465 = vmatprep.mubr.f32.mxu0 0.0
        %466 = vmatmul.mubr.f32.gmra.mxu0 %v241
        %v467 = vpop.f32.mrf.mxu0
        %v468 = vadd.f32 0.0, %v467
        %v469 = vpop.f32.mrf.mxu0
        %470 = vmatprep.mubr.f32.mxu0 0.0
        %471 = vmatmul.mubr.f32.gmra.mxu0 %v242
        %v472 = vpop.f32.mrf.mxu0
        %v473 = vadd.f32 0.0, %v472
        %v474 = vpop.f32.mrf.mxu0
        %475 = vmatprep.mubr.f32.mxu0 0.0
        %476 = vmatmul.mubr.f32.gmra.mxu0 %v243
        %v477 = vpop.f32.mrf.mxu0
        %v478 = vadd.f32 0.0, %v477
        %v479 = vpop.f32.mrf.mxu0
        %480 = vmatprep.mubr.f32.mxu0 0.0
        %481 = vmatmul.mubr.f32.gmra.mxu0 %v244
        %v482 = vpop.f32.mrf.mxu0
        %v483 = vadd.f32 0.0, %v482
        %v484 = vpop.f32.mrf.mxu0
        %485 = vdwg.mxu0
        %v486 = vld [vmem:[#allocation7] sm:$0x1]
        %v487 = vadd.f32 %v328, %v333
        %v488 = vadd.f32 %v487, %v338
        %v489 = vadd.f32 %v488, %v343
        %v490 = vadd.f32 %v489, %v348
        %v491 = vadd.f32 %v490, %v353
        %v492 = vadd.f32 %v491, %v358
        %v493 = vadd.f32 %v492, %v363
        %v494 = vadd.f32 %v493, %v368
        %v495 = vadd.f32 %v494, %v373
        %v496 = vadd.f32 %v495, %v378
        %v497 = vadd.f32 %v496, %v383
        %v498 = vadd.f32 %v497, %v388
        %v499 = vadd.f32 %v498, %v393
        %v500 = vadd.f32 %v499, %v398
        %v501 = vadd.f32 %v500, %v403
        %v502 = vadd.f32 %v501, %v408
        %v503 = vadd.f32 %v502, %v413
        %v504 = vadd.f32 %v503, %v418
        %v505 = vadd.f32 %v504, %v423
        %v506 = vadd.f32 %v505, %v428
        %v507 = vadd.f32 %v506, %v433
        %v508 = vadd.f32 %v507, %v438
        %v509 = vadd.f32 %v508, %v443
        %v510 = vadd.f32 %v509, %v448
        %v511 = vadd.f32 %v510, %v453
        %v512 = vadd.f32 %v511, %v458
        %v513 = vadd.f32 %v512, %v463
        %v514 = vadd.f32 %v513, %v468
        %v515 = vadd.f32 %v514, %v473
        %v516 = vadd.f32 %v515, %v478
        %v517 = vadd.f32 %v516, %v483
        %v518 = vrot.slane %v517, 4
        %v519 = vadd.f32 %v517, %v518
        %v520 = vrot.slane %v519, 2
        %v521 = vadd.f32 %v519, %v520
        %v522 = vrot.slane %v521, 1
        %v523 = vadd.f32 %v521, %v522
        %v524 = vadd.f32 %v486, %v523
        %525 = vst [vmem:[#allocation7] sm:$0x1] %v524
        %v526 = vld [vmem:[#allocation8] sm:$0xff]
        %v527 = vld [vmem:[#allocation8 + $0x8] sm:$0xff]
        %v528 = vld [vmem:[#allocation8 + $0x10] sm:$0xff]
        %v529 = vld [vmem:[#allocation8 + $0x18] sm:$0xff]
        %v530 = vld [vmem:[#allocation8 + $0x20] sm:$0xff]
        %v531 = vld [vmem:[#allocation8 + $0x28] sm:$0xff]
        %v532 = vld [vmem:[#allocation8 + $0x30] sm:$0xff]
        %v533 = vld [vmem:[#allocation8 + $0x38] sm:$0xff]
        %v534 = vld [vmem:[#allocation8 + $0x40] sm:$0xff]
        %v535 = vld [vmem:[#allocation8 + $0x48] sm:$0xff]
        %v536 = vld [vmem:[#allocation8 + $0x50] sm:$0xff]
        %v537 = vld [vmem:[#allocation8 + $0x58] sm:$0xff]
        %v538 = vld [vmem:[#allocation8 + $0x60] sm:$0xff]
        %v539 = vld [vmem:[#allocation8 + $0x68] sm:$0xff]
        %v540 = vld [vmem:[#allocation8 + $0x70] sm:$0xff]
        %v541 = vld [vmem:[#allocation8 + $0x78] sm:$0xff]
        %542 = vxpose.xlu0.b32.start [1/16] %v328, 128
        %543 = vxpose.xlu0.b32.cont [2/16] %v333, 128
        %544 = vxpose.xlu0.b32.cont [3/16] %v338, 128
        %545 = vxpose.xlu0.b32.cont [4/16] %v343, 128
        %546 = vxpose.xlu0.b32.cont [5/16] %v348, 128
        %547 = vxpose.xlu0.b32.cont [6/16] %v353, 128
        %548 = vxpose.xlu0.b32.cont [7/16] %v358, 128
        %549 = vxpose.xlu0.b32.cont [8/16] %v363, 128
        %550 = vxpose.xlu0.b32.cont [9/16] %v368, 128
        %551 = vxpose.xlu0.b32.cont [10/16] %v373, 128
        %552 = vxpose.xlu0.b32.cont [11/16] %v378, 128
        %553 = vxpose.xlu0.b32.cont [12/16] %v383, 128
        %554 = vxpose.xlu0.b32.cont [13/16] %v388, 128
        %555 = vxpose.xlu0.b32.cont [14/16] %v393, 128
        %556 = vxpose.xlu0.b32.cont [15/16] %v398, 128
        %557 = vxpose.xlu0.b32.end [16/16] %v403, 128
        %v558 = vpop.trf.xlu0
        %v559 = vpop.trf.xlu0
        %v560 = vpop.trf.xlu0
        %v561 = vpop.trf.xlu0
        %v562 = vpop.trf.xlu0
        %v563 = vpop.trf.xlu0
        %v564 = vpop.trf.xlu0
        %v565 = vpop.trf.xlu0
        %v566 = vpop.trf.xlu0
        %v567 = vpop.trf.xlu0
        %v568 = vpop.trf.xlu0
        %v569 = vpop.trf.xlu0
        %v570 = vpop.trf.xlu0
        %v571 = vpop.trf.xlu0
        %v572 = vpop.trf.xlu0
        %v573 = vpop.trf.xlu0
        %574 = vxpose.xlu0.b32.start [1/16] %v408, 128
        %575 = vxpose.xlu0.b32.cont [2/16] %v413, 128
        %576 = vxpose.xlu0.b32.cont [3/16] %v418, 128
        %577 = vxpose.xlu0.b32.cont [4/16] %v423, 128
        %578 = vxpose.xlu0.b32.cont [5/16] %v428, 128
        %579 = vxpose.xlu0.b32.cont [6/16] %v433, 128
        %580 = vxpose.xlu0.b32.cont [7/16] %v438, 128
        %581 = vxpose.xlu0.b32.cont [8/16] %v443, 128
        %582 = vxpose.xlu0.b32.cont [9/16] %v448, 128
        %583 = vxpose.xlu0.b32.cont [10/16] %v453, 128
        %584 = vxpose.xlu0.b32.cont [11/16] %v458, 128
        %585 = vxpose.xlu0.b32.cont [12/16] %v463, 128
        %586 = vxpose.xlu0.b32.cont [13/16] %v468, 128
        %587 = vxpose.xlu0.b32.cont [14/16] %v473, 128
        %588 = vxpose.xlu0.b32.cont [15/16] %v478, 128
        %589 = vxpose.xlu0.b32.end [16/16] %v483, 128
        %v590 = vpop.trf.xlu0
        %v591 = vpop.trf.xlu0
        %v592 = vpop.trf.xlu0
        %v593 = vpop.trf.xlu0
        %v594 = vpop.trf.xlu0
        %v595 = vpop.trf.xlu0
        %v596 = vpop.trf.xlu0
        %v597 = vpop.trf.xlu0
        %v598 = vpop.trf.xlu0
        %v599 = vpop.trf.xlu0
        %v600 = vpop.trf.xlu0
        %v601 = vpop.trf.xlu0
        %v602 = vpop.trf.xlu0
        %v603 = vpop.trf.xlu0
        %v604 = vpop.trf.xlu0
        %v605 = vpop.trf.xlu0
        %606 = vmatprep.subr.mxu0 0.0
        %607 = vmatpush1.msra.mxu0 %v403
        %608 = vmatprep.subr.mxu0 0.0
        %609 = vmatpush1.msra.mxu0 %v398
        %610 = vmatprep.subr.mxu0 0.0
        %611 = vmatpush1.msra.mxu0 %v393
        %612 = vmatprep.subr.mxu0 0.0
        %613 = vmatpush1.msra.mxu0 %v388
        %614 = vmatprep.subr.mxu0 0.0
        %615 = vmatpush1.msra.mxu0 %v383
        %616 = vmatprep.subr.mxu0 0.0
        %617 = vmatpush1.msra.mxu0 %v378
        %618 = vmatprep.subr.mxu0 0.0
        %619 = vmatpush1.msra.mxu0 %v373
        %620 = vmatprep.subr.mxu0 0.0
        %621 = vmatpush1.msra.mxu0 %v368
        %622 = vmatprep.subr.mxu0 0.0
        %623 = vmatpush1.msra.mxu0 %v363
        %624 = vmatprep.subr.mxu0 0.0
        %625 = vmatpush1.msra.mxu0 %v358
        %626 = vmatprep.subr.mxu0 0.0
        %627 = vmatpush1.msra.mxu0 %v353
        %628 = vmatprep.subr.mxu0 0.0
        %629 = vmatpush1.msra.mxu0 %v348
        %630 = vmatprep.subr.mxu0 0.0
        %631 = vmatpush1.msra.mxu0 %v343
        %632 = vmatprep.subr.mxu0 0.0
        %633 = vmatpush1.msra.mxu0 %v338
        %634 = vmatprep.subr.mxu0 0.0
        %635 = vmatpush1.msra.mxu0 %v333
        %636 = vmatprep.subr.mxu0 0.0
        %637 = vmatpush1.msra.mxu0 %v328
        %638 = vmatprep.subr.mxu0 0.0
        %639 = vmatpush2.msra.mxu0 %v483
        %640 = vmatprep.subr.mxu0 0.0
        %641 = vmatpush2.msra.mxu0 %v478
        %642 = vmatprep.subr.mxu0 0.0
        %643 = vmatpush2.msra.mxu0 %v473
        %644 = vmatprep.subr.mxu0 0.0
        %645 = vmatpush2.msra.mxu0 %v468
        %646 = vmatprep.subr.mxu0 0.0
        %647 = vmatpush2.msra.mxu0 %v463
        %648 = vmatprep.subr.mxu0 0.0
        %649 = vmatpush2.msra.mxu0 %v458
        %650 = vmatprep.subr.mxu0 0.0
        %651 = vmatpush2.msra.mxu0 %v453
        %652 = vmatprep.subr.mxu0 0.0
        %653 = vmatpush2.msra.mxu0 %v448
        %654 = vmatprep.subr.mxu0 0.0
        %655 = vmatpush2.msra.mxu0 %v443
        %656 = vmatprep.subr.mxu0 0.0
        %657 = vmatpush2.msra.mxu0 %v438
        %658 = vmatprep.subr.mxu0 0.0
        %659 = vmatpush2.msra.mxu0 %v433
        %660 = vmatprep.subr.mxu0 0.0
        %661 = vmatpush2.msra.mxu0 %v428
        %662 = vmatprep.subr.mxu0 0.0
        %663 = vmatpush2.msra.mxu0 %v423
        %664 = vmatprep.subr.mxu0 0.0
        %665 = vmatpush2.msra.mxu0 %v418
        %666 = vmatprep.subr.mxu0 0.0
        %667 = vmatpush2.msra.mxu0 %v413
        %668 = vmatprep.subr.mxu0 0.0
        %669 = vmatpush2.msra.mxu0 %v408
        %670 = vmatprep.mubr.f32.mxu0 %v590
        %671 = vmatmul.mubr.f32.gmra.mxu0 %v558
        %v672 = vpop.f32.mrf.mxu0
        %v673 = vadd.f32 0.0, %v672
        %v674 = vpop.f32.mrf.mxu0
        %675 = vmatprep.mubr.f32.mxu0 %v591
        %676 = vmatmul.mubr.f32.gmra.mxu0 %v559
        %v677 = vpop.f32.mrf.mxu0
        %v678 = vadd.f32 0.0, %v677
        %v679 = vpop.f32.mrf.mxu0
        %680 = vmatprep.mubr.f32.mxu0 %v592
        %681 = vmatmul.mubr.f32.gmra.mxu0 %v560
        %v682 = vpop.f32.mrf.mxu0
        %v683 = vadd.f32 0.0, %v682
        %v684 = vpop.f32.mrf.mxu0
        %685 = vmatprep.mubr.f32.mxu0 %v593
        %686 = vmatmul.mubr.f32.gmra.mxu0 %v561
        %v687 = vpop.f32.mrf.mxu0
        %v688 = vadd.f32 0.0, %v687
        %v689 = vpop.f32.mrf.mxu0
        %690 = vmatprep.mubr.f32.mxu0 %v594
        %691 = vmatmul.mubr.f32.gmra.mxu0 %v562
        %v692 = vpop.f32.mrf.mxu0
        %v693 = vadd.f32 0.0, %v692
        %v694 = vpop.f32.mrf.mxu0
        %695 = vmatprep.mubr.f32.mxu0 %v595
        %696 = vmatmul.mubr.f32.gmra.mxu0 %v563
        %v697 = vpop.f32.mrf.mxu0
        %v698 = vadd.f32 0.0, %v697
        %v699 = vpop.f32.mrf.mxu0
        %700 = vmatprep.mubr.f32.mxu0 %v596
        %701 = vmatmul.mubr.f32.gmra.mxu0 %v564
        %v702 = vpop.f32.mrf.mxu0
        %v703 = vadd.f32 0.0, %v702
        %v704 = vpop.f32.mrf.mxu0
        %705 = vmatprep.mubr.f32.mxu0 %v597
        %706 = vmatmul.mubr.f32.gmra.mxu0 %v565
        %v707 = vpop.f32.mrf.mxu0
        %v708 = vadd.f32 0.0, %v707
        %v709 = vpop.f32.mrf.mxu0
        %710 = vmatprep.mubr.f32.mxu0 %v598
        %711 = vmatmul.mubr.f32.gmra.mxu0 %v566
        %v712 = vpop.f32.mrf.mxu0
        %v713 = vadd.f32 0.0, %v712
        %v714 = vpop.f32.mrf.mxu0
        %715 = vmatprep.mubr.f32.mxu0 %v599
        %716 = vmatmul.mubr.f32.gmra.mxu0 %v567
        %v717 = vpop.f32.mrf.mxu0
        %v718 = vadd.f32 0.0, %v717
        %v719 = vpop.f32.mrf.mxu0
        %720 = vmatprep.mubr.f32.mxu0 %v600
        %721 = vmatmul.mubr.f32.gmra.mxu0 %v568
        %v722 = vpop.f32.mrf.mxu0
        %v723 = vadd.f32 0.0, %v722
        %v724 = vpop.f32.mrf.mxu0
        %725 = vmatprep.mubr.f32.mxu0 %v601
        %726 = vmatmul.mubr.f32.gmra.mxu0 %v569
        %v727 = vpop.f32.mrf.mxu0
        %v728 = vadd.f32 0.0, %v727
        %v729 = vpop.f32.mrf.mxu0
        %730 = vmatprep.mubr.f32.mxu0 %v602
        %731 = vmatmul.mubr.f32.gmra.mxu0 %v570
        %v732 = vpop.f32.mrf.mxu0
        %v733 = vadd.f32 0.0, %v732
        %v734 = vpop.f32.mrf.mxu0
        %735 = vmatprep.mubr.f32.mxu0 %v603
        %736 = vmatmul.mubr.f32.gmra.mxu0 %v571
        %v737 = vpop.f32.mrf.mxu0
        %v738 = vadd.f32 0.0, %v737
        %v739 = vpop.f32.mrf.mxu0
        %740 = vmatprep.mubr.f32.mxu0 %v604
        %741 = vmatmul.mubr.f32.gmra.mxu0 %v572
        %v742 = vpop.f32.mrf.mxu0
        %v743 = vadd.f32 0.0, %v742
        %v744 = vpop.f32.mrf.mxu0
        %745 = vmatprep.mubr.f32.mxu0 %v605
        %746 = vmatmul.mubr.f32.gmra.mxu0 %v573
        %v747 = vpop.f32.mrf.mxu0
        %v748 = vadd.f32 0.0, %v747
        %v749 = vpop.f32.mrf.mxu0
        %750 = vdwg.mxu0
        %v751 = vadd.f32 %v526, %v673
        %v752 = vadd.f32 %v527, %v678
        %v753 = vadd.f32 %v528, %v683
        %v754 = vadd.f32 %v529, %v688
        %v755 = vadd.f32 %v530, %v693
        %v756 = vadd.f32 %v531, %v698
        %v757 = vadd.f32 %v532, %v703
        %v758 = vadd.f32 %v533, %v708
        %v759 = vadd.f32 %v534, %v713
        %v760 = vadd.f32 %v535, %v718
        %v761 = vadd.f32 %v536, %v723
        %v762 = vadd.f32 %v537, %v728
        %v763 = vadd.f32 %v538, %v733
        %v764 = vadd.f32 %v539, %v738
        %v765 = vadd.f32 %v540, %v743
        %v766 = vadd.f32 %v541, %v748
        %767 = vst [vmem:[#allocation8] sm:$0xff] %v751
        %768 = vst [vmem:[#allocation8 + $0x8] sm:$0xff] %v752
        %769 = vst [vmem:[#allocation8 + $0x10] sm:$0xff] %v753
        %770 = vst [vmem:[#allocation8 + $0x18] sm:$0xff] %v754
        %771 = vst [vmem:[#allocation8 + $0x20] sm:$0xff] %v755
        %772 = vst [vmem:[#allocation8 + $0x28] sm:$0xff] %v756
        %773 = vst [vmem:[#allocation8 + $0x30] sm:$0xff] %v757
        %774 = vst [vmem:[#allocation8 + $0x38] sm:$0xff] %v758
        %775 = vst [vmem:[#allocation8 + $0x40] sm:$0xff] %v759
        %776 = vst [vmem:[#allocation8 + $0x48] sm:$0xff] %v760
        %777 = vst [vmem:[#allocation8 + $0x50] sm:$0xff] %v761
        %778 = vst [vmem:[#allocation8 + $0x58] sm:$0xff] %v762
        %779 = vst [vmem:[#allocation8 + $0x60] sm:$0xff] %v763
        %780 = vst [vmem:[#allocation8 + $0x68] sm:$0xff] %v764
        %781 = vst [vmem:[#allocation8 + $0x70] sm:$0xff] %v765
        %782 = vst [vmem:[#allocation8 + $0x78] sm:$0xff] %v766
        // Predicated region
        $region41: #{tpu_custom_call.1} parent=27 // pred_check
          %p783 = pneg %p81
        $region42: #{tpu_custom_call.1} parent=27 // pred_check_branch
          %785 = sbr.rel (%p783) target = $region44
        $region43: #{tpu_custom_call.1} parent=27 // pred_region
          %s787 = ssub.s32 16, 16
          %788 = vsyncadd [#allocation4], %s787
          %s790 = sshll.u32 [#allocation7], 4
          %s791 = int_to_ptr.vmem [resolvable:$true] %s790
          %793 = dma.vmem_to_hbm [thread:$0]  %s791, 16, %s2, [#allocation4]
        $region44: #{tpu_custom_call.1} parent=27 // pred_fallthru
          _
        // Predicated region
        $region45: #{tpu_custom_call.1} parent=27 // pred_check
          %p794 = pneg %p102
        $region46: #{tpu_custom_call.1} parent=27 // pred_check_branch
          %796 = sbr.rel (%p794) target = $region48
        $region47: #{tpu_custom_call.1} parent=27 // pred_region
          %s798 = ssub.s32 2048, 2048
          %799 = vsyncadd [#allocation9], %s798
          %s800 = sshll.u32 [#allocation8], 4
          %s801 = int_to_ptr.vmem [resolvable:$true] %s800
          %806 = dma.vmem_to_hbm [thread:$0]  %s801, 2048, %s3, [#allocation9], 128, 128, 8
        $region48: #{tpu_custom_call.1} parent=27 // pred_fallthru
          _
        // Predicated region
        $region49: #{tpu_custom_call.1} parent=27 // pred_check
          %p807 = pneg %p81
        $region50: #{tpu_custom_call.1} parent=27 // pred_check_branch
          %809 = sbr.rel (%p807) target = $region52
        $region51: #{tpu_custom_call.1} parent=27 // pred_region
          %810 = dma.done [#allocation4], 16
        $region52: #{tpu_custom_call.1} parent=27 // pred_fallthru
          _
        // Predicated region
        $region53: #{tpu_custom_call.1} parent=27 // pred_check
          %p811 = pneg %p102
        $region54: #{tpu_custom_call.1} parent=27 // pred_check_branch
          %813 = sbr.rel (%p811) target = $region56
        $region55: #{tpu_custom_call.1} parent=27 // pred_region
          %814 = dma.done [#allocation9], 2048
        $region56: #{tpu_custom_call.1} parent=27 // pred_fallthru
          _
      $region28: #{tpu_custom_call.1} parent=5 // pred_fallthru
        _
      %p815 = scmp.le.s32.totalorder 2, %s16
      // Predicated region
      $region57: #{tpu_custom_call.1} parent=5 // pred_check
        %p816 = pneg %p815
      $region58: #{tpu_custom_call.1} parent=5 // pred_check_branch
        %818 = sbr.rel (%p816) target = $region60
      $region59: #{tpu_custom_call.1} parent=5 // pred_region
        %s819 = ssub.s32 %s16, 2
      $region60: #{tpu_custom_call.1} parent=5 // pred_fallthru
        _
    $region6: #{tpu_custom_call.1} parent=1 // loop_footer
      %s20 = sadd.s32 1, %s16
    $region7: #{tpu_custom_call.1} parent=1 // loop_footer_branch
      %15 = sbr.rel target = $region3
    $region8: #{tpu_custom_call.1} parent=1 // loop_exit
      _
    %820 = vsyncpa [#allocation3], 1
    %s821 = scalar_lea.sflag [#allocation3], 1
    %822 = vsyncpa %s821, 1
    %823 = vsyncpa [#allocation6], 1
    %824 = vsyncpa [#allocation4], 1
    %s825 = scalar_lea.sflag [#allocation4], 1
    %826 = vsyncpa %s825, 1
    %827 = vsyncpa [#allocation9], 1

</llo_original>
